<compile_context>
chip_gen: v7x
topology: tpu7x:2x2x1
jax: 0.10.0
libtpu: 0.0.40
codegen_flags: <defaults>
</compile_context>

<pallas_src>
import functools

import jax
import jax.numpy as jnp
from jax.experimental import pallas as pl
from jax.experimental.pallas import tpu as pltpu

LANE = 128


def _round_up(x, m):
    return ((x + m - 1) // m) * m


def _vmem_limit(n_bytes):
    # Above v5e's 16 MiB default scoped limit, below v7x's 64 MiB physical.
    return int(min(max(2 * n_bytes, 32 * 1024 * 1024), 60 * 1024 * 1024))


# ---------------------------------------------------------------------------
# Shared in-kernel cell math (padded hidden width Hp, multiple of 128 lanes).
# ---------------------------------------------------------------------------
def _gru_cell(x, h, wih_ref, whh_ref, bias_ref, bhn_ref, Hp):
    wdt = wih_ref.dtype
    # Two packed MXU matmuls (N = 3*Hp, lane-dense), f32 accumulation.
    gi = jnp.dot(x.astype(wdt), wih_ref[...], preferred_element_type=jnp.float32)
    gh = jnp.dot(h.astype(wdt), whh_ref[...], preferred_element_type=jnp.float32)

    # Packed bias already contains (b_ir+b_hr, b_iz+b_hz, b_in).
    pre = gi + bias_ref[...]

    # Gate slices sit at 128-aligned lane boundaries (Hp % 128 == 0).
    r = jax.nn.sigmoid(pre[:, :Hp] + gh[:, :Hp])
    z = jax.nn.sigmoid(pre[:, Hp:2 * Hp] + gh[:, Hp:2 * Hp])
    n = jnp.tanh(pre[:, 2 * Hp:] + r * (gh[:, 2 * Hp:] + bhn_ref[...]))

    h32 = h.astype(jnp.float32)
    # (1 - z) * n + z * h  ==  n + z * (h - n)
    return n + z * (h32 - n)


def gru_step_kernel(h_ref, x_ref, wih_ref, whh_ref, bias_ref, bhn_ref,
                    out_ref, *, Hp):
    """Single GRUCell step; out aliases the padded-h input buffer."""
    h_new = _gru_cell(x_ref[...], h_ref[...], wih_ref, whh_ref, bias_ref,
                      bhn_ref, Hp)
    out_ref[...] = h_new.astype(out_ref.dtype)


def gru_seq_kernel(x_ref, h0_ref, wih_ref, whh_ref, bias_ref, bhn_ref,
                   out_ref, h_scr, *, Hp):
    """One timestep of the fused time loop (grid=(T,)); h carried in scratch."""
    @pl.when(pl.program_id(0) == 0)
    def _():
        h_scr[...] = h0_ref[...].astype(h_scr.dtype)

    h_new = _gru_cell(x_ref[...], h_scr[...], wih_ref, whh_ref, bias_ref,
                      bhn_ref, Hp)
    h_scr[...] = h_new
    out_ref[...] = h_new.astype(out_ref.dtype)


# ---------------------------------------------------------------------------
# One-time host-side packing of PyTorch-layout GRUCell params.
# ---------------------------------------------------------------------------
def pack_gru_params(params, input_size, hidden_size, lane=LANE,
                    weight_dtype=jnp.bfloat16):
    """Returns packed, pre-transposed, lane-padded (and bf16) weights:
      wih : (input_size, 3*Hp)   weight_dtype
      whh : (Hp, 3*Hp)           weight_dtype
      bias: (1, 3*Hp)  f32       [b_ir+b_hr | b_iz+b_hz | b_in]
      bhn : (1, Hp)    f32
    """
    H = hidden_size
    Hp = _round_up(max(H, lane), lane)
    w_ih, w_hh = params["weight_ih"], params["weight_hh"]   # (3H,in), (3H,H)
    b_ih, b_hh = params["bias_ih"], params["bias_hh"]        # (3H,), (3H,)

    def gate_t(w, i):              # per-gate, transposed: (K, H)
        return w[i * H:(i + 1) * H, :].T

    def pad_cols(w):               # zero-pad H -> Hp along lanes
        return jnp.pad(w, ((0, 0), (0, Hp - H)))

    wih_p = jnp.concatenate([pad_cols(gate_t(w_ih, i)) for i in range(3)],
                            axis=1)                                  # (in, 3Hp)
    whh_p = jnp.concatenate([pad_cols(gate_t(w_hh, i)) for i in range(3)],
                            axis=1)
    whh_p = jnp.pad(whh_p, ((0, Hp - H), (0, 0)))                    # (Hp, 3Hp)

    def pad_vec(v):
        return jnp.pad(v, (0, Hp - H))

    b_r = pad_vec(b_ih[:H] + b_hh[:H])
    b_z = pad_vec(b_ih[H:2 * H] + b_hh[H:2 * H])
    b_n = pad_vec(b_ih[2 * H:])
    bias_p = jnp.concatenate([b_r, b_z, b_n]).reshape(1, 3 * Hp)
    bhn_p = pad_vec(b_hh[2 * H:]).reshape(1, Hp)

    return {"wih": wih_p.astype(weight_dtype),
            "whh": whh_p.astype(weight_dtype),
            "bias": bias_p.astype(jnp.float32),
            "bhn": bhn_p.astype(jnp.float32),
            "H": H, "Hp": Hp}


# ---------------------------------------------------------------------------
# Single-step forward (module semantics): h' = GRUCell(g, prev_h).
# ---------------------------------------------------------------------------
@functools.partial(jax.jit, static_argnames=("H", "Hp"))
def _gru_step(g, prev_h, wih, whh, bias, bhn, H, Hp):
    B, in_size = g.shape
    h_pad = prev_h if H == Hp else jnp.pad(prev_h, ((0, 0), (0, Hp - H)))

    wbytes = wih.dtype.itemsize * (in_size * 3 * Hp + Hp * 3 * Hp)
    act_bytes = 4 * (B * in_size + 3 * B * Hp + 4 * Hp)
    cost = pl.CostEstimate(flops=2 * B * (in_size + Hp) * 3 * Hp,
                           transcendentals=3 * B * Hp,
                           bytes_accessed=wbytes + act_bytes)

    vmem = pl.BlockSpec(memory_space=pltpu.MemorySpace.VMEM)
    out = pl.pallas_call(
        functools.partial(gru_step_kernel, Hp=Hp),
        out_shape=jax.ShapeDtypeStruct((B, Hp), prev_h.dtype),
        in_specs=[vmem] * 6,
        out_specs=vmem,
        input_output_aliases={0: 0},          # h_pad buffer reused for h'
        compiler_params=pltpu.CompilerParams(
            vmem_limit_bytes=_vmem_limit(wbytes + act_bytes)),
        cost_estimate=cost,
    )(h_pad, g, wih, whh, bias, bhn)
    return out if H == Hp else out[:, :H]


def gru_core_network(g, prev_h, packed):
    """Forward pass of GRUCoreNetwork: one GRUCell step (packed params)."""
    return _gru_step(g, prev_h, packed["wih"], packed["whh"], packed["bias"],
                     packed["bhn"], H=packed["H"], Hp=packed["Hp"])


# ---------------------------------------------------------------------------
# Fused-sequence form: step the same cell over (T, B, in) inside ONE kernel.
# Weights stay VMEM-resident; hidden state lives in VMEM scratch.
# ---------------------------------------------------------------------------
@functools.partial(jax.jit, static_argnames=("H", "Hp"))
def _gru_sequence(x_seq, h0, wih, whh, bias, bhn, H, Hp):
    T, B, in_size = x_seq.shape
    h0p = h0 if H == Hp else jnp.pad(h0, ((0, 0), (0, Hp - H)))

    wbytes = wih.dtype.itemsize * (in_size * 3 * Hp + Hp * 3 * Hp)
    io_bytes = 4 * (T * B * in_size + T * B * Hp + B * Hp + 4 * Hp)
    cost = pl.CostEstimate(flops=2 * T * B * (in_size + Hp) * 3 * Hp,
                           transcendentals=3 * T * B * Hp,
                           bytes_accessed=wbytes + io_bytes)

    # TODO(synk): for large B, add a leading "parallel" batch grid axis (tile
    # Bt <= 64 at Hp=128) to bound vreg pressure and use v7x's second core.
    grid_spec = pltpu.PrefetchScalarGridSpec(
        num_scalar_prefetch=0,
        grid=(T,),
        in_specs=[
            pl.BlockSpec((None, B, in_size), lambda t: (t, 0, 0)),   # x_t
            pl.BlockSpec((B, Hp), lambda t: (0, 0)),                 # h0
            pl.BlockSpec((in_size, 3 * Hp), lambda t: (0, 0)),       # wih (VMEM-resident)
            pl.BlockSpec((Hp, 3 * Hp), lambda t: (0, 0)),            # whh (VMEM-resident)
            pl.BlockSpec((1, 3 * Hp), lambda t: (0, 0)),             # packed bias
            pl.BlockSpec((1, Hp), lambda t: (0, 0)),                 # b_hn
        ],
        out_specs=pl.BlockSpec((None, B, Hp), lambda t: (t, 0, 0)),
        scratch_shapes=[pltpu.VMEM((B, Hp), jnp.float32)],           # h carry
    )

    # Per-step x/out blocks double-buffered; weights a single resident copy.
    vmem_need = wbytes + 4 * (2 * B * in_size + 2 * B * Hp + 2 * B * Hp + 4 * Hp)

    out = pl.pallas_call(
        functools.partial(gru_seq_kernel, Hp=Hp),
        out_shape=jax.ShapeDtypeStruct((T, B, Hp), h0.dtype),
        grid_spec=grid_spec,
        compiler_params=pltpu.CompilerParams(
            dimension_semantics=("arbitrary",),   # sequential carry over time
            vmem_limit_bytes=_vmem_limit(vmem_need)),
        cost_estimate=cost,
    )(x_seq, h0p, wih, whh, bias, bhn)
    return out if H == Hp else out[:, :, :H]


def gru_core_network_sequence(x_seq, h0, packed):
    """Apply the GRUCell over a (T, B, in) sequence inside one kernel."""
    return _gru_sequence(x_seq, h0, packed["wih"], packed["whh"],
                         packed["bias"], packed["bhn"],
                         H=packed["H"], Hp=packed["Hp"])


# ---------------------------------------------------------------------------
# Pure-JAX reference (f32 weights) matching torch.nn.GRUCell.
# ---------------------------------------------------------------------------
def gru_ref(g, prev_h, params):
    H = prev_h.shape[1]
    w_ih, w_hh, b_ih, b_hh = (params["weight_ih"], params["weight_hh"],
                              params["bias_ih"], params["bias_hh"])
    gi = g @ w_ih.T + b_ih
    gh = prev_h @ w_hh.T + b_hh
    i_r, i_z, i_n = gi[:, :H], gi[:, H:2 * H], gi[:, 2 * H:]
    h_r, h_z, h_n = gh[:, :H], gh[:, H:2 * H], gh[:, 2 * H:]
    r = jax.nn.sigmoid(i_r + h_r)
    z = jax.nn.sigmoid(i_z + h_z)
    n = jnp.tanh(i_n + r * h_n)
    return (1.0 - z) * n + z * prev_h


def init_params(key, input_size, hidden_size):
    # PyTorch GRUCell default init: uniform(-1/sqrt(H), 1/sqrt(H)).
    k = 1.0 / jnp.sqrt(hidden_size)
    k1, k2, k3, k4 = jax.random.split(key, 4)
    return {
        "weight_ih": jax.random.uniform(k1, (3 * hidden_size, input_size),
                                        jnp.float32, -k, k),
        "weight_hh": jax.random.uniform(k2, (3 * hidden_size, hidden_size),
                                        jnp.float32, -k, k),
        "bias_ih": jax.random.uniform(k3, (3 * hidden_size,), jnp.float32, -k, k),
        "bias_hh": jax.random.uniform(k4, (3 * hidden_size,), jnp.float32, -k, k),
    }


if __name__ == "__main__":
    key = jax.random.PRNGKey(0)
    k_param, k_g, k_h, k_seq = jax.random.split(key, 4)

    batch, input_size, hidden_size, seq_len = 8, 16, 32, 8
    params = init_params(k_param, input_size, hidden_size)

    # One-time packing (hoisted out of the per-step path); weights -> bf16.
    packed = pack_gru_params(params, input_size, hidden_size)

    g = jax.random.normal(k_g, (batch, input_size), jnp.float32)
    prev_h = jnp.zeros((batch, hidden_size), jnp.float32)  # init_hidden(batch)
    prev_h = prev_h + 0.1 * jax.random.normal(k_h, (batch, hidden_size),
                                              jnp.float32)

    # ---- Single-step forward (module semantics) ----
    h_kernel = gru_core_network(g, prev_h, packed)
    jax.block_until_ready(h_kernel)
    h_ref = gru_ref(g, prev_h, params)
    assert h_kernel.shape == (batch, hidden_size)
    # bf16 weights => loosened tolerance vs. the f32 reference.
    assert jnp.allclose(h_kernel, h_ref, atol=2e-2, rtol=2e-2)

    # ---- Fused time loop (grid=(T,), weights VMEM-resident, h in scratch) ----
    x_seq = jax.random.normal(k_seq, (seq_len, batch, input_size), jnp.float32)
    h_seq = gru_core_network_sequence(x_seq, prev_h, packed)
    jax.block_until_ready(h_seq)

    h = prev_h
    refs = []
    for t in range(seq_len):
        h = gru_ref(x_seq[t], h, params)
        refs.append(h)
    h_seq_ref = jnp.stack(refs, axis=0)
    assert h_seq.shape == (seq_len, batch, hidden_size)
    assert jnp.allclose(h_seq, h_seq_ref, atol=3e-2, rtol=3e-2)

    print("KERNEL_OK")
</pallas_src>

<mosaic_0001>
module attributes {stable_mosaic.version = 11 : i64} {
  func.func @gru_step_kernel(%arg0: memref<8x128xf32, #tpu.memory_space<vmem>>, %arg1: memref<8x16xf32, #tpu.memory_space<vmem>>, %arg2: memref<16x384xbf16, #tpu.memory_space<vmem>>, %arg3: memref<128x384xbf16, #tpu.memory_space<vmem>>, %arg4: memref<1x384xf32, #tpu.memory_space<vmem>>, %arg5: memref<1x128xf32, #tpu.memory_space<vmem>>, %arg6: memref<8x128xf32, #tpu.memory_space<vmem>>) attributes {dimension_semantics = [], scalar_prefetch = 0 : i64, scratch_operands = 0 : i64, tpu.core_type = #tpu.core_type<tc>} {
    %c0 = arith.constant 0 : index
    %c0_0 = arith.constant 0 : index
    %0 = vector.load %arg1[%c0, %c0_0] : memref<8x16xf32, #tpu.memory_space<vmem>>, vector<8x16xf32>
    %c0_1 = arith.constant 0 : index
    %c0_2 = arith.constant 0 : index
    %1 = vector.load %arg0[%c0_1, %c0_2] : memref<8x128xf32, #tpu.memory_space<vmem>>, vector<8x128xf32>
    %2 = arith.truncf %0 : vector<8x16xf32> to vector<8x16xbf16>
    %c0_3 = arith.constant 0 : index
    %c0_4 = arith.constant 0 : index
    %3 = vector.load %arg2[%c0_3, %c0_4] : memref<16x384xbf16, #tpu.memory_space<vmem>>, vector<16x384xbf16>
    %cst = arith.constant dense<0.000000e+00> : vector<8x384xf32>
    %4 = tpu.matmul %2, %3, %cst {dimension_numbers = #tpu.dot_dimension_numbers<[1], [0], [0], [1], [0, 0, 1, 1], [], []>} : vector<8x16xbf16>, vector<16x384xbf16>, vector<8x384xf32> -> vector<8x384xf32>
    %5 = arith.truncf %1 : vector<8x128xf32> to vector<8x128xbf16>
    %c0_5 = arith.constant 0 : index
    %c0_6 = arith.constant 0 : index
    %6 = vector.load %arg3[%c0_5, %c0_6] : memref<128x384xbf16, #tpu.memory_space<vmem>>, vector<128x384xbf16>
    %cst_7 = arith.constant dense<0.000000e+00> : vector<8x384xf32>
    %7 = tpu.matmul %5, %6, %cst_7 {dimension_numbers = #tpu.dot_dimension_numbers<[1], [0], [0], [1], [0, 0, 1, 1], [], []>} : vector<8x128xbf16>, vector<128x384xbf16>, vector<8x384xf32> -> vector<8x384xf32>
    %c0_8 = arith.constant 0 : index
    %c0_9 = arith.constant 0 : index
    %8 = vector.load %arg4[%c0_8, %c0_9] : memref<1x384xf32, #tpu.memory_space<vmem>>, vector<1x384xf32>
    %9 = vector.broadcast %8 : vector<1x384xf32> to vector<8x384xf32>
    %10 = arith.addf %4, %9 : vector<8x384xf32>
    %11 = vector.extract_strided_slice %10 {offsets = [0, 0], sizes = [8, 128], strides = [1, 1]} : vector<8x384xf32> to vector<8x128xf32>
    %12 = vector.extract_strided_slice %7 {offsets = [0, 0], sizes = [8, 128], strides = [1, 1]} : vector<8x384xf32> to vector<8x128xf32>
    %13 = arith.addf %11, %12 : vector<8x128xf32>
    %14 = arith.negf %13 : vector<8x128xf32>
    %15 = math.exp %14 : vector<8x128xf32>
    %cst_10 = arith.constant 1.000000e+00 : f32
    %16 = vector.broadcast %cst_10 : f32 to vector<8x128xf32>
    %17 = arith.addf %16, %15 : vector<8x128xf32>
    %18 = arith.divf %16, %17 : vector<8x128xf32>
    %19 = vector.extract_strided_slice %10 {offsets = [0, 128], sizes = [8, 128], strides = [1, 1]} : vector<8x384xf32> to vector<8x128xf32>
    %20 = vector.extract_strided_slice %7 {offsets = [0, 128], sizes = [8, 128], strides = [1, 1]} : vector<8x384xf32> to vector<8x128xf32>
    %21 = arith.addf %19, %20 : vector<8x128xf32>
    %22 = arith.negf %21 : vector<8x128xf32>
    %23 = math.exp %22 : vector<8x128xf32>
    %cst_11 = arith.constant 1.000000e+00 : f32
    %24 = vector.broadcast %cst_11 : f32 to vector<8x128xf32>
    %25 = arith.addf %24, %23 : vector<8x128xf32>
    %26 = arith.divf %24, %25 : vector<8x128xf32>
    %27 = vector.extract_strided_slice %10 {offsets = [0, 256], sizes = [8, 128], strides = [1, 1]} : vector<8x384xf32> to vector<8x128xf32>
    %28 = vector.extract_strided_slice %7 {offsets = [0, 256], sizes = [8, 128], strides = [1, 1]} : vector<8x384xf32> to vector<8x128xf32>
    %c0_12 = arith.constant 0 : index
    %c0_13 = arith.constant 0 : index
    %29 = vector.load %arg5[%c0_12, %c0_13] : memref<1x128xf32, #tpu.memory_space<vmem>>, vector<1x128xf32>
    %30 = vector.broadcast %29 : vector<1x128xf32> to vector<8x128xf32>
    %31 = arith.addf %28, %30 : vector<8x128xf32>
    %32 = arith.mulf %18, %31 : vector<8x128xf32>
    %33 = arith.addf %27, %32 : vector<8x128xf32>
    %34 = math.tanh %33 : vector<8x128xf32>
    %35 = arith.subf %1, %34 : vector<8x128xf32>
    %36 = arith.mulf %26, %35 : vector<8x128xf32>
    %37 = arith.addf %34, %36 : vector<8x128xf32>
    %c0_14 = arith.constant 0 : index
    %c0_15 = arith.constant 0 : index
    %38 = vector.load %arg6[%c0_14, %c0_15] : memref<8x128xf32, #tpu.memory_space<vmem>>, vector<8x128xf32>
    tpu.vector_store %arg6[%c0_14, %c0_15], %37 {strides = array<i32>} : memref<8x128xf32, #tpu.memory_space<vmem>>, vector<8x128xf32>,
    return
  }
}

</mosaic_0001>

<llo_original>
// kernel: _gru_step.1
$region0: #{_gru_step.1}
  #allocation0 [shape = 'u32[]', space=smem, size = 0x4, offset = 0x4, fixed_abs, tag = 'smem constant byte address 0x4 - core index']
  #allocation1 [shape = 'u32[144,128]{1,0:T(1,128)}', space=vmem, size = 0x12000, scoped, tag = 'internal scratch']
  %s0 = inlined_call_operand.vmem [shape: f32[8,128], index: 0, kind: input, shape index: {}, may-alias: {0,6}]
  %s1 = inlined_call_operand.hbm [shape: f32[8,16], index: 1, kind: input, shape index: {}]
  %s2 = inlined_call_operand.vmem [shape: bf16[16,384], index: 2, kind: input, shape index: {}]
  %s3 = inlined_call_operand.hbm [shape: bf16[128,384], index: 3, kind: input, shape index: {}]
  %s4 = inlined_call_operand.vmem [shape: f32[1,384], index: 4, kind: input, shape index: {}]
  %s5 = inlined_call_operand.vmem [shape: f32[1,128], index: 5, kind: input, shape index: {}]
  %s6 = inlined_call_operand.vmem [shape: f32[8,128], index: 6, kind: output, shape index: {}, may-alias: {0,6}]
  %s7 = sld [smem:[#allocation0]]
  $region42: #{_gru_step.1} parent=0
    _
  %s9 = ssub.s32 1, %s7
  %s10 = scalar_select 0, %s9, %s7
  $region1: #{_gru_step.1} parent=0
    #allocation2 [shape = 'u8[4096]{0}', space=vmem, size = 0x1000, scoped, tag = 'input window, operand 1, single buffered']
    #allocation3 [shape = 's32[1]{0}', space=sflag, size = 0x4, scoped, tag = 'scoped memory for _gru_step.1']
    #allocation4 [shape = 'u8[98304]{0}', space=vmem, size = 0x18000, scoped, tag = 'input window, operand 3, single buffered']
    #allocation5 [shape = 's32[1]{0}', space=sflag, size = 0x4, scoped, tag = 'scoped memory for _gru_step.1']
    %11 = vsyncpa [#allocation3], 0
    %12 = vsyncpa [#allocation5], 0
    // Predicated region
    $region2: #{_gru_step.1} parent=1 // pred_check
      _
    $region3: #{_gru_step.1} parent=1 // pred_check_branch
      %14 = sbr.rel (0) target = $region5
    $region4: #{_gru_step.1} parent=1 // pred_region
      _
    $region5: #{_gru_step.1} parent=1 // pred_fallthru
      _
    // Predicated region
    $region6: #{_gru_step.1} parent=1 // pred_check
      _
    $region7: #{_gru_step.1} parent=1 // pred_check_branch
      %16 = sbr.rel (0) target = $region9
    $region8: #{_gru_step.1} parent=1 // pred_region
      %s18 = ssub.s32 128, 128
      %19 = vsyncadd [#allocation3], %s18
      %s21 = sshll.u32 [#allocation2], 4
      %s22 = int_to_ptr.vmem [resolvable:$true] %s21
      %24 = dma.hbm_to_vmem [thread:$0]  %s1, 128, %s22, [#allocation3]
    $region9: #{_gru_step.1} parent=1 // pred_fallthru
      _
    // Predicated region
    $region10: #{_gru_step.1} parent=1 // pred_check
      _
    $region11: #{_gru_step.1} parent=1 // pred_check_branch
      %26 = sbr.rel (0) target = $region13
    $region12: #{_gru_step.1} parent=1 // pred_region
      _
    $region13: #{_gru_step.1} parent=1 // pred_fallthru
      _
    // Predicated region
    $region14: #{_gru_step.1} parent=1 // pred_check
      _
    $region15: #{_gru_step.1} parent=1 // pred_check_branch
      %28 = sbr.rel (0) target = $region17
    $region16: #{_gru_step.1} parent=1 // pred_region
      %s30 = ssub.s32 3072, 3072
      %31 = vsyncadd [#allocation5], %s30
      %s32 = sshll.u32 [#allocation4], 4
      %s33 = int_to_ptr.vmem [resolvable:$true] %s32
      %38 = dma.hbm_to_vmem [thread:$0]  %s3, 3072, %s33, [#allocation5], 192, 192, 12
    $region17: #{_gru_step.1} parent=1 // pred_fallthru
      _
    // Predicated region
    $region18: #{_gru_step.1} parent=1 // pred_check
      _
    $region19: #{_gru_step.1} parent=1 // pred_check_branch
      %40 = sbr.rel (0) target = $region21
    $region20: #{_gru_step.1} parent=1 // pred_region
      _
    $region21: #{_gru_step.1} parent=1 // pred_fallthru
      _
    // Predicated region
    $region22: #{_gru_step.1} parent=1 // pred_check
      _
    $region23: #{_gru_step.1} parent=1 // pred_check_branch
      %42 = sbr.rel (0) target = $region25
    $region24: #{_gru_step.1} parent=1 // pred_region
      _
    $region25: #{_gru_step.1} parent=1 // pred_fallthru
      _
    // Predicated region
    $region26: #{_gru_step.1} parent=1 // pred_check
      _
    $region27: #{_gru_step.1} parent=1 // pred_check_branch
      %44 = sbr.rel (0) target = $region29
    $region28: #{_gru_step.1} parent=1 // pred_region
      %45 = dma.done [#allocation3], 128
    $region29: #{_gru_step.1} parent=1 // pred_fallthru
      _
    // Predicated region
    $region30: #{_gru_step.1} parent=1 // pred_check
      _
    $region31: #{_gru_step.1} parent=1 // pred_check_branch
      %47 = sbr.rel (0) target = $region33
    $region32: #{_gru_step.1} parent=1 // pred_region
      %48 = dma.done [#allocation5], 3072
    $region33: #{_gru_step.1} parent=1 // pred_fallthru
      _
    %v50 = vld [vmem:[#allocation2] sm:$0xff]
    %v51 = vld [vmem:[%s0] sm:$0xff]
    %v52 = vpack.c.bf16 %v50, %v50
    %v53 = vld [vmem:[%s2] sm:$0xff]
    %v54 = vld [vmem:[%s2 + $0x8] sm:$0xf]
    %v55 = vld [vmem:[%s2 + $0xc] sm:$0xff]
    %v56 = vld [vmem:[%s2 + $0x14] sm:$0xf]
    %v57 = vpack.c.bf16 %v51, %v51
    %v58 = vld [vmem:[#allocation4] sm:$0xff]
    %v59 = vld [vmem:[#allocation4 + $0x8] sm:$0xf]
    %v60 = vld [vmem:[#allocation4 + $0xc] sm:$0xff]
    %v61 = vld [vmem:[#allocation4 + $0x14] sm:$0xf]
    %v62 = vld [vmem:[#allocation4 + $0x18] sm:$0xff]
    %v63 = vld [vmem:[#allocation4 + $0x20] sm:$0xf]
    %v64 = vld [vmem:[#allocation4 + $0x24] sm:$0xff]
    %v65 = vld [vmem:[#allocation4 + $0x2c] sm:$0xf]
    %v66 = vld [vmem:[#allocation4 + $0x30] sm:$0xff]
    %v67 = vld [vmem:[#allocation4 + $0x38] sm:$0xf]
    %v68 = vld [vmem:[#allocation4 + $0x3c] sm:$0xff]
    %v69 = vld [vmem:[#allocation4 + $0x44] sm:$0xf]
    %v70 = vld [vmem:[#allocation4 + $0x48] sm:$0xff]
    %v71 = vld [vmem:[#allocation4 + $0x50] sm:$0xf]
    %v72 = vld [vmem:[#allocation4 + $0x54] sm:$0xff]
    %v73 = vld [vmem:[#allocation4 + $0x5c] sm:$0xf]
    %v74 = vld [vmem:[#allocation4 + $0x60] sm:$0xff]
    %v75 = vld [vmem:[#allocation4 + $0x68] sm:$0xf]
    %v76 = vld [vmem:[#allocation4 + $0x6c] sm:$0xff]
    %v77 = vld [vmem:[#allocation4 + $0x74] sm:$0xf]
    %v78 = vld [vmem:[#allocation4 + $0x78] sm:$0xff]
    %v79 = vld [vmem:[#allocation4 + $0x80] sm:$0xf]
    %v80 = vld [vmem:[#allocation4 + $0x84] sm:$0xff]
    %v81 = vld [vmem:[#allocation4 + $0x8c] sm:$0xf]
    %v82 = vld [vmem:[#allocation4 + $0x90] sm:$0xff]
    %v83 = vld [vmem:[#allocation4 + $0x98] sm:$0xf]
    %v84 = vld [vmem:[#allocation4 + $0x9c] sm:$0xff]
    %v85 = vld [vmem:[#allocation4 + $0xa4] sm:$0xf]
    %v86 = vld [vmem:[#allocation4 + $0xa8] sm:$0xff]
    %v87 = vld [vmem:[#allocation4 + $0xb0] sm:$0xf]
    %v88 = vld [vmem:[#allocation4 + $0xb4] sm:$0xff]
    %v89 = vld [vmem:[#allocation4 + $0xbc] sm:$0xf]
    %v122 = vunpack.c.l.b16 %v58
    %v123 = vunpack.c.h.b16 %v58
    %v124 = vunpack.c.l.b16 %v59
    %v125 = vunpack.c.l.b16 %v60
    %v126 = vunpack.c.h.b16 %v60
    %v127 = vunpack.c.l.b16 %v61
    %v128 = vunpack.c.l.b16 %v62
    %v129 = vunpack.c.h.b16 %v62
    %v130 = vunpack.c.l.b16 %v63
    %v131 = vunpack.c.l.b16 %v64
    %v132 = vunpack.c.h.b16 %v64
    %v133 = vunpack.c.l.b16 %v65
    %v134 = vunpack.c.l.b16 %v66
    %v135 = vunpack.c.h.b16 %v66
    %v136 = vunpack.c.l.b16 %v67
    %v137 = vunpack.c.l.b16 %v68
    %v138 = vunpack.c.h.b16 %v68
    %v139 = vunpack.c.l.b16 %v69
    %v140 = vunpack.c.l.b16 %v70
    %v141 = vunpack.c.h.b16 %v70
    %v142 = vunpack.c.l.b16 %v71
    %v143 = vunpack.c.l.b16 %v72
    %v144 = vunpack.c.h.b16 %v72
    %v145 = vunpack.c.l.b16 %v73
    %v146 = vunpack.c.l.b16 %v74
    %v147 = vunpack.c.h.b16 %v74
    %v148 = vunpack.c.l.b16 %v75
    %v149 = vunpack.c.l.b16 %v76
    %v150 = vunpack.c.h.b16 %v76
    %v151 = vunpack.c.l.b16 %v77
    %v152 = vunpack.c.l.b16 %v78
    %v153 = vunpack.c.h.b16 %v78
    %v154 = vunpack.c.l.b16 %v79
    %v155 = vunpack.c.l.b16 %v80
    %v156 = vunpack.c.h.b16 %v80
    %v157 = vunpack.c.l.b16 %v81
    %v158 = vunpack.c.l.b16 %v82
    %v159 = vunpack.c.h.b16 %v82
    %v160 = vunpack.c.l.b16 %v83
    %v161 = vunpack.c.l.b16 %v84
    %v162 = vunpack.c.h.b16 %v84
    %v163 = vunpack.c.l.b16 %v85
    %v164 = vunpack.c.l.b16 %v86
    %v165 = vunpack.c.h.b16 %v86
    %v166 = vunpack.c.l.b16 %v87
    %v167 = vunpack.c.l.b16 %v88
    %v168 = vunpack.c.h.b16 %v88
    %v169 = vunpack.c.l.b16 %v89
    %v170 = vpack.c.b16 %v125, %v122
    %v171 = vpack.c.b16 %v126, %v123
    %v172 = vpack.c.b16 %v127, %v124
    %v173 = vpack.c.b16 %v131, %v128
    %v174 = vpack.c.b16 %v132, %v129
    %v175 = vpack.c.b16 %v133, %v130
    %v176 = vpack.c.b16 %v137, %v134
    %v177 = vpack.c.b16 %v138, %v135
    %v178 = vpack.c.b16 %v139, %v136
    %v179 = vpack.c.b16 %v143, %v140
    %v180 = vpack.c.b16 %v144, %v141
    %v181 = vpack.c.b16 %v145, %v142
    %v182 = vpack.c.b16 %v149, %v146
    %v183 = vpack.c.b16 %v150, %v147
    %v184 = vpack.c.b16 %v151, %v148
    %v185 = vpack.c.b16 %v155, %v152
    %v186 = vpack.c.b16 %v156, %v153
    %v187 = vpack.c.b16 %v157, %v154
    %v188 = vpack.c.b16 %v161, %v158
    %v189 = vpack.c.b16 %v162, %v159
    %v190 = vpack.c.b16 %v163, %v160
    %v191 = vpack.c.b16 %v167, %v164
    %v192 = vpack.c.b16 %v168, %v165
    %v193 = vpack.c.b16 %v169, %v166
    %218 = vmatprep.subr.bf16.mxu0 %v171
    %219 = vmatpush1.bf16.msra.mxu0 %v170
    %220 = vmatprep.subr.bf16.mxu0 %v174
    %221 = vmatpush1.bf16.msra.mxu0 %v173
    %222 = vmatprep.subr.bf16.mxu0 %v177
    %223 = vmatpush1.bf16.msra.mxu0 %v176
    %224 = vmatprep.subr.bf16.mxu0 %v180
    %225 = vmatpush1.bf16.msra.mxu0 %v179
    %226 = vmatprep.subr.bf16.mxu0 %v183
    %227 = vmatpush1.bf16.msra.mxu0 %v182
    %228 = vmatprep.subr.bf16.mxu0 %v186
    %229 = vmatpush1.bf16.msra.mxu0 %v185
    %230 = vmatprep.subr.bf16.mxu0 %v189
    %231 = vmatpush1.bf16.msra.mxu0 %v188
    %232 = vmatprep.subr.bf16.mxu0 %v192
    %233 = vmatpush1.bf16.msra.mxu0 %v191
    %234 = vmatprep.subr.bf16.mxu0 0
    %235 = vmatpush1.bf16.msra.mxu0 0
    %236 = vmatprep.subr.bf16.mxu0 0
    %237 = vmatpush1.bf16.msra.mxu0 0
    %238 = vmatprep.subr.bf16.mxu0 0
    %239 = vmatpush1.bf16.msra.mxu0 0
    %240 = vmatprep.subr.bf16.mxu0 0
    %241 = vmatpush1.bf16.msra.mxu0 0
    %242 = vmatprep.subr.bf16.mxu0 0
    %243 = vmatpush1.bf16.msra.mxu0 0
    %244 = vmatprep.subr.bf16.mxu0 0
    %245 = vmatpush1.bf16.msra.mxu0 0
    %246 = vmatprep.subr.bf16.mxu0 0
    %247 = vmatpush1.bf16.msra.mxu0 0
    %248 = vmatprep.subr.bf16.mxu0 0
    %249 = vmatpush1.bf16.msra.mxu0 0
    %250 = vmatprep.mubr.bf16.mxu0 0
    %251 = vmatmul.mubr.bf16.gmra.mrb[0].mxu0 %v57
    %v252 = vpop.f32.mrb[0].mxu0
    %v253 = vadd.f32 0.0, %v252
    %v254 = vpop.f32.mrb[0].mxu0
    %v255 = vadd.f32 0.0, %v254
    %v256 = vpop.f32.mrb[0].mxu0
    %v257 = vpop.f32.mrb[0].mxu0
    %258 = vdwg.mxu0
    %259 = vmatprep.subr.bf16.mxu0 0
    %260 = vmatpush1.bf16.msra.mxu0 %v172
    %261 = vmatprep.subr.bf16.mxu0 0
    %262 = vmatpush1.bf16.msra.mxu0 %v175
    %263 = vmatprep.subr.bf16.mxu0 0
    %264 = vmatpush1.bf16.msra.mxu0 %v178
    %265 = vmatprep.subr.bf16.mxu0 0
    %266 = vmatpush1.bf16.msra.mxu0 %v181
    %267 = vmatprep.subr.bf16.mxu0 0
    %268 = vmatpush1.bf16.msra.mxu0 %v184
    %269 = vmatprep.subr.bf16.mxu0 0
    %270 = vmatpush1.bf16.msra.mxu0 %v187
    %271 = vmatprep.subr.bf16.mxu0 0
    %272 = vmatpush1.bf16.msra.mxu0 %v190
    %273 = vmatprep.subr.bf16.mxu0 0
    %274 = vmatpush1.bf16.msra.mxu0 %v193
    %275 = vmatprep.subr.bf16.mxu0 0
    %276 = vmatpush1.bf16.msra.mxu0 0
    %277 = vmatprep.subr.bf16.mxu0 0
    %278 = vmatpush1.bf16.msra.mxu0 0
    %279 = vmatprep.subr.bf16.mxu0 0
    %280 = vmatpush1.bf16.msra.mxu0 0
    %281 = vmatprep.subr.bf16.mxu0 0
    %282 = vmatpush1.bf16.msra.mxu0 0
    %283 = vmatprep.subr.bf16.mxu0 0
    %284 = vmatpush1.bf16.msra.mxu0 0
    %285 = vmatprep.subr.bf16.mxu0 0
    %286 = vmatpush1.bf16.msra.mxu0 0
    %287 = vmatprep.subr.bf16.mxu0 0
    %288 = vmatpush1.bf16.msra.mxu0 0
    %289 = vmatprep.subr.bf16.mxu0 0
    %290 = vmatpush1.bf16.msra.mxu0 0
    %291 = vmatprep.mubr.bf16.mxu0 0
    %292 = vmatmul.mubr.bf16.gmra.mrb[0].mxu0 %v57
    %v293 = vpop.f32.mrb[0].mxu0
    %v294 = vadd.f32 0.0, %v293
    %v295 = vpop.f32.mrb[0].mxu0
    %v296 = vpop.f32.mrb[0].mxu0
    %v297 = vpop.f32.mrb[0].mxu0
    %298 = vdwg.mxu0
    %v299 = vld [vmem:[%s4] sm:$0x7]
    %v301 = vlaneseq
    %v302 = vshrl.u32 %v301, 7
    %v303 = vsub.s32 0, %v302
    %v304 = vrot.slane %v299, %v303
    %v305 = vlaneseq
    %v306 = vshrl.u32 %v305, 7
    %v307 = vsub.s32 1, %v306
    %v308 = vrot.slane %v299, %v307
    %v309 = vlaneseq
    %v310 = vshrl.u32 %v309, 7
    %v311 = vsub.s32 2, %v310
    %v312 = vrot.slane %v299, %v311
    %v320 = vunpack.c.l.b16 %v53
    %v321 = vunpack.c.h.b16 %v53
    %v322 = vunpack.c.l.b16 %v54
    %v323 = vunpack.c.l.b16 %v55
    %v324 = vunpack.c.h.b16 %v55
    %v325 = vunpack.c.l.b16 %v56
    %v326 = vpack.c.b16 %v323, %v320
    %v327 = vpack.c.b16 %v324, %v321
    %v328 = vpack.c.b16 %v325, %v322
    %vm332 = vcmask 130048
    %v334 = vsel %vm332, %v52, 0
    %336 = vmatprep.subr.bf16.mxu0 %v327
    %337 = vmatpush1.bf16.msra.mxu0 %v326
    %338 = vmatprep.subr.bf16.mxu0 0
    %339 = vmatpush1.bf16.msra.mxu0 0
    %340 = vmatprep.subr.bf16.mxu0 0
    %341 = vmatpush1.bf16.msra.mxu0 0
    %342 = vmatprep.subr.bf16.mxu0 0
    %343 = vmatpush1.bf16.msra.mxu0 0
    %344 = vmatprep.subr.bf16.mxu0 0
    %345 = vmatpush1.bf16.msra.mxu0 0
    %346 = vmatprep.subr.bf16.mxu0 0
    %347 = vmatpush1.bf16.msra.mxu0 0
    %348 = vmatprep.subr.bf16.mxu0 0
    %349 = vmatpush1.bf16.msra.mxu0 0
    %350 = vmatprep.subr.bf16.mxu0 0
    %351 = vmatpush1.bf16.msra.mxu0 0
    %352 = vmatprep.subr.bf16.mxu0 0
    %353 = vmatpush1.bf16.msra.mxu0 0
    %354 = vmatprep.subr.bf16.mxu0 0
    %355 = vmatpush1.bf16.msra.mxu0 0
    %356 = vmatprep.subr.bf16.mxu0 0
    %357 = vmatpush1.bf16.msra.mxu0 0
    %358 = vmatprep.subr.bf16.mxu0 0
    %359 = vmatpush1.bf16.msra.mxu0 0
    %360 = vmatprep.subr.bf16.mxu0 0
    %361 = vmatpush1.bf16.msra.mxu0 0
    %362 = vmatprep.subr.bf16.mxu0 0
    %363 = vmatpush1.bf16.msra.mxu0 0
    %364 = vmatprep.subr.bf16.mxu0 0
    %365 = vmatpush1.bf16.msra.mxu0 0
    %366 = vmatprep.subr.bf16.mxu0 0
    %367 = vmatpush1.bf16.msra.mxu0 0
    %368 = vmatprep.mubr.bf16.mxu0 0
    %369 = vmatmul.mubr.bf16.gmra.mrb[0].mxu0 %v334
    %v370 = vpop.f32.mrb[0].mxu0
    %v371 = vadd.f32 %v304, %v370
    %v372 = vpop.f32.mrb[0].mxu0
    %v373 = vadd.f32 %v308, %v372
    %v374 = vpop.f32.mrb[0].mxu0
    %v375 = vpop.f32.mrb[0].mxu0
    %376 = vdwg.mxu0
    %377 = vmatprep.subr.bf16.mxu0 0
    %378 = vmatpush1.bf16.msra.mxu0 %v328
    %379 = vmatprep.subr.bf16.mxu0 0
    %380 = vmatpush1.bf16.msra.mxu0 0
    %381 = vmatprep.subr.bf16.mxu0 0
    %382 = vmatpush1.bf16.msra.mxu0 0
    %383 = vmatprep.subr.bf16.mxu0 0
    %384 = vmatpush1.bf16.msra.mxu0 0
    %385 = vmatprep.subr.bf16.mxu0 0
    %386 = vmatpush1.bf16.msra.mxu0 0
    %387 = vmatprep.subr.bf16.mxu0 0
    %388 = vmatpush1.bf16.msra.mxu0 0
    %389 = vmatprep.subr.bf16.mxu0 0
    %390 = vmatpush1.bf16.msra.mxu0 0
    %391 = vmatprep.subr.bf16.mxu0 0
    %392 = vmatpush1.bf16.msra.mxu0 0
    %393 = vmatprep.subr.bf16.mxu0 0
    %394 = vmatpush1.bf16.msra.mxu0 0
    %395 = vmatprep.subr.bf16.mxu0 0
    %396 = vmatpush1.bf16.msra.mxu0 0
    %397 = vmatprep.subr.bf16.mxu0 0
    %398 = vmatpush1.bf16.msra.mxu0 0
    %399 = vmatprep.subr.bf16.mxu0 0
    %400 = vmatpush1.bf16.msra.mxu0 0
    %401 = vmatprep.subr.bf16.mxu0 0
    %402 = vmatpush1.bf16.msra.mxu0 0
    %403 = vmatprep.subr.bf16.mxu0 0
    %404 = vmatpush1.bf16.msra.mxu0 0
    %405 = vmatprep.subr.bf16.mxu0 0
    %406 = vmatpush1.bf16.msra.mxu0 0
    %407 = vmatprep.subr.bf16.mxu0 0
    %408 = vmatpush1.bf16.msra.mxu0 0
    %409 = vmatprep.mubr.bf16.mxu0 0
    %410 = vmatmul.mubr.bf16.gmra.mrb[0].mxu0 %v334
    %v411 = vpop.f32.mrb[0].mxu0
    %v412 = vadd.f32 %v312, %v411
    %v413 = vpop.f32.mrb[0].mxu0
    %v414 = vpop.f32.mrb[0].mxu0
    %v415 = vpop.f32.mrb[0].mxu0
    %416 = vdwg.mxu0
    %v417 = vadd.f32 %v371, %v253
    %v418 = vxor.u32 %v417, 2147483648
    %v419 = vmul.f32 %v418, 1.442695
    %v420 = vpow.pop %v419
    %v421 = vadd.f32 %v420, 1.0
    %v422 = vrcp.pop %v421
    %v423 = vmul.f32 1.0, %v422
    %v424 = vadd.f32 %v373, %v255
    %v425 = vxor.u32 %v424, 2147483648
    %v426 = vmul.f32 %v425, 1.442695
    %v427 = vpow.pop %v426
    %v428 = vadd.f32 %v427, 1.0
    %v429 = vrcp.pop %v428
    %v430 = vmul.f32 1.0, %v429
    %v431 = vld [vmem:[%s5] sm:$0x1]
    %v433 = vlaneseq
    %v434 = vshrl.u32 %v433, 7
    %v435 = vsub.s32 0, %v434
    %v436 = vrot.slane %v431, %v435
    %v438 = vadd.f32 %v294, %v436
    %v439 = vmul.f32 %v423, %v438
    %v440 = vadd.f32 %v412, %v439
    %v441 = vtanh.pop %v440
    %v442 = vsub.f32 %v51, %v441
    %v443 = vmul.f32 %v430, %v442
    %v444 = vadd.f32 %v441, %v443
    %445 = vst [vmem:[%s6] sm:$0xff] %v444
    // Predicated region
    $region34: #{_gru_step.1} parent=1 // pred_check
      _
    $region35: #{_gru_step.1} parent=1 // pred_check_branch
      %447 = sbr.rel (0) target = $region37
    $region36: #{_gru_step.1} parent=1 // pred_region
      _
    $region37: #{_gru_step.1} parent=1 // pred_fallthru
      _
    // Predicated region
    $region38: #{_gru_step.1} parent=1 // pred_check
      _
    $region39: #{_gru_step.1} parent=1 // pred_check_branch
      %449 = sbr.rel (0) target = $region41
    $region40: #{_gru_step.1} parent=1 // pred_region
      _
    $region41: #{_gru_step.1} parent=1 // pred_fallthru
      _
    %450 = vsyncpa [#allocation3], 1
    %451 = vsyncpa [#allocation5], 1

</llo_original>
